<compile_context>
chip_gen: v6e
topology: v6e:2x2x1
jax: 0.10.0
libtpu: 0.0.40
codegen_flags: <defaults>
</compile_context>

<pallas_src>
import jax
import jax.numpy as jnp
from jax.experimental import pallas as pl
from jax.experimental.pallas import tpu as pltpu

# ---- static problem sizes (match the PyTorch module) ----
B = 2                         # batch
L = 48                        # sequence length (module input is (B, L, C_IN))
C_IN = 4                      # Conv1d in_channels
C_OUT = 3                     # Conv1d out_channels
K = 17                        # Conv1d kernel_size
POOL_K = 4                    # tf_kernel (MaxPool1d kernel_size)
L_CONV = L - K + 1            # 32  valid conv output length
P = L_CONV // POOL_K          # 8   pooled length (floor, like PyTorch)
F = C_OUT * P                 # 24  LazyLinear in_features
N_CLASSES = 2
V = L_CONV - POOL_K + 1       # 29  width of the in-kernel sliding-window max

CB = C_OUT * B                # 6   rows of the conv output block   (row = o*B + b)
CIB = C_OUT * C_IN * B        # 24  rows of the packed conv weights (row = o*C_IN*B + i*B + b)
NCB = N_CLASSES * C_OUT * B   # 12  rows of the packed fc weights   (row = n*C_OUT*B + c*B + b)

# packed-parameter buffer layout (single operand, lane-dense, width V=29):
#   rows [0, CIB)        cols [0, K)  : conv taps, row o*C_IN*B + i*B + b = conv_w[o, i, :]
#   rows [0, CB)         col  K       : conv bias, row o*B + b = conv_b[o]
#   rows [CIB, CIB+NCB)  cols [0, V)  : fc weight for pooled window p at lane 4p (zeros elsewhere)
#   row  CIB+NCB         cols [0, 2)  : fc bias
FC_ROW0 = CIB                 # 24
FCB_ROW = CIB + NCB           # 36
P_ROWS = CIB + NCB + 1        # 37


def conv_v0_kernel(x_ref, p_ref, o_ref):
    """Fused Conv1d -> ReLU -> MaxPool1d -> Linear. VPU only, no scratch.

    x_ref : (C_IN*B, L)       = (8, 48)   row i*B + b holds x[b, :, i]
    p_ref : (P_ROWS, V)       = (37, 29)  packed parameters (layout above)
    o_ref : (B, N_CLASSES)    = (2, 2)
    """
    # conv params (taps + bias column) as one small register-resident block
    cw = p_ref[0:CIB, 0:K + 1]                                   # (24, 18)

    # ---- Conv1d (cross-correlation): K broadcast FMAs per output channel.
    #      Each tap's activation window is an offset load straight off x_ref
    #      (vld slot); C_OUT separate accumulators, no replicated copy of x. ----
    accs = [jnp.zeros((C_IN * B, L_CONV), jnp.float32) for _ in range(C_OUT)]
    for k in range(K):                                           # static unroll (17)
        xk = x_ref[:, k:k + L_CONV]                              # (8, 32)
        for o in range(C_OUT):                                   # static unroll (3)
            accs[o] = accs[o] + cw[o * C_IN * B:(o + 1) * C_IN * B, k:k + 1] * xk

    # Reduce over input channels i: rows i*B + b -> rows b, per output channel o.
    blocks = []
    for o in range(C_OUT):                                       # static unroll
        blocks.append(sum(accs[o][i * B:(i + 1) * B] for i in range(C_IN)))  # (2, 32)
    y = jnp.concatenate(blocks, axis=0)                          # (6, 32), row o*B + b
    y = y + cw[0:CB, K:K + 1]                                    # + conv bias (lane broadcast)
    y = jnp.maximum(y, 0.0)                                      # ReLU

    # ---- MaxPool1d(4) kept in registers: sliding max of width 4.
    #      v[:, t] = max(y[:, t:t+4]); the pooled value of window p lives at lane 4p,
    #      where the packed FC weights are non-zero (all other lanes are zeroed). ----
    u = jnp.maximum(y[:, 0:L_CONV - 2], y[:, 2:L_CONV])          # (6, 30)
    v = jnp.maximum(u[:, 0:V], u[:, 1:V + 1])                    # (6, 29)

    # Dropout(p=0.25) is the identity at inference time (eval mode).

    # ---- Linear(F=24 -> 2): VPU multiply + lane reduce + sublane adds (no MXU).
    #      NOTE: the zero-weight masking of non-window lanes assumes finite inputs
    #      (0 * NaN would leak NaN into the logits, unlike the reference). ----
    fcw = p_ref[FC_ROW0:FC_ROW0 + NCB, 0:V]                      # (12, 29)
    cols = []
    for n in range(N_CLASSES):                                   # static unroll (2)
        z = v * fcw[n * CB:(n + 1) * CB, :]                      # (6, 29)
        s = jnp.sum(z, axis=1, keepdims=True)                    # (6, 1)  lane reduce
        cols.append(sum(s[c * B:(c + 1) * B] for c in range(C_OUT)))        # (2, 1)
    out = jnp.concatenate(cols, axis=1)                          # (2, 2)
    out = out + p_ref[FCB_ROW:FCB_ROW + 1, 0:N_CLASSES]          # + fc bias
    o_ref[...] = out.astype(o_ref.dtype)


def pack_params(conv_w, conv_b, fc_w, fc_b):
    """Pack all module parameters into one lane-dense (37, 29) f32 buffer.

    Runs ONCE per weight set (not per forward call)."""
    f32 = jnp.float32
    params = jnp.zeros((P_ROWS, V), f32)

    # conv taps: row o*C_IN*B + i*B + b = conv_w[o, i, :]
    w_col = jnp.broadcast_to(conv_w[:, :, None, :],
                             (C_OUT, C_IN, B, K)).reshape(CIB, K).astype(f32)
    params = params.at[0:CIB, 0:K].set(w_col)
    # conv bias column: row o*B + b = conv_b[o]
    b_col = jnp.broadcast_to(conv_b[:, None], (C_OUT, B)).reshape(CB, 1).astype(f32)
    params = params.at[0:CB, K:K + 1].set(b_col)

    # fc weights: value for pooled window p placed at lane 4p (zeros elsewhere),
    # row n*C_OUT*B + c*B + b = fc_w[n, c*P + p]
    fcw3 = fc_w.reshape(N_CLASSES, C_OUT, P).astype(f32)
    fcx = jnp.zeros((N_CLASSES, C_OUT, B, V), f32)
    fcx = fcx.at[:, :, :, 0::POOL_K].set(
        jnp.broadcast_to(fcw3[:, :, None, :], (N_CLASSES, C_OUT, B, P)))
    params = params.at[FC_ROW0:FC_ROW0 + NCB, :].set(fcx.reshape(NCB, V))
    # fc bias
    params = params.at[FCB_ROW, 0:N_CLASSES].set(fc_b.astype(f32))
    return params


def make_conv_v0_forward(conv_w, conv_b, fc_w, fc_b):
    """Returns a jitted forward(x) with the packed parameters precomputed and cached."""
    params = jax.block_until_ready(pack_params(conv_w, conv_b, fc_w, fc_b))

    call = pl.pallas_call(
        conv_v0_kernel,
        out_shape=jax.ShapeDtypeStruct((B, N_CLASSES), jnp.float32),
        in_specs=[pl.BlockSpec(memory_space=pltpu.MemorySpace.VMEM)] * 2,
        out_specs=pl.BlockSpec(memory_space=pltpu.MemorySpace.VMEM),
    )

    @jax.jit
    def forward(x):
        # lane-dense activation: (C_IN*B, L), row i*B + b = x[b, :, i]
        x2d = jnp.transpose(x, (2, 0, 1)).reshape(C_IN * B, L).astype(jnp.float32)
        return call(x2d, params)

    return forward


def reference_forward(x, conv_w, conv_b, fc_w, fc_b):
    """Pure-JAX reference matching PyTorch Conv_v0 (eval mode), f32-exact contractions."""
    hi = jax.lax.Precision.HIGHEST
    xc = jnp.transpose(x, (0, 2, 1))                               # (B, C_IN, L)
    y = jnp.zeros((B, C_OUT, L_CONV), jnp.float32)
    for k in range(K):
        y = y + jnp.einsum('oi,bil->bol', conv_w[:, :, k],
                           xc[:, :, k:k + L_CONV], precision=hi)
    y = y + conv_b[None, :, None]
    y = jnp.maximum(y, 0.0)
    pooled = jnp.max(y.reshape(B, C_OUT, P, POOL_K), axis=-1)      # (B, C_OUT, P)
    flat = pooled.reshape(B, F)                                    # channel-major flatten
    return jnp.dot(flat, fc_w.T, precision=hi) + fc_b[None, :]


if __name__ == "__main__":
    key = jax.random.PRNGKey(0)
    kx, kw, kb, kfw, kfb = jax.random.split(key, 5)

    # deterministic inputs / parameters (synthetic init, module shapes)
    x = jax.random.normal(kx, (B, L, C_IN), dtype=jnp.float32)
    conv_w = 0.1 * jax.random.normal(kw, (C_OUT, C_IN, K), dtype=jnp.float32)
    conv_b = 0.1 * jax.random.normal(kb, (C_OUT,), dtype=jnp.float32)
    fc_w = 0.1 * jax.random.normal(kfw, (N_CLASSES, F), dtype=jnp.float32)
    fc_b = 0.1 * jax.random.normal(kfb, (N_CLASSES,), dtype=jnp.float32)

    forward = make_conv_v0_forward(conv_w, conv_b, fc_w, fc_b)   # packs params once
    out = jax.block_until_ready(forward(x))
    ref = reference_forward(x, conv_w, conv_b, fc_w, fc_b)

    assert out.shape == (B, N_CLASSES)
    assert jnp.allclose(out, ref, atol=1e-4, rtol=1e-4), (out, ref)
    print("KERNEL_OK")
</pallas_src>

<mosaic_0001>
module attributes {stable_mosaic.version = 11 : i64} {
  func.func @conv_v0_kernel(%arg0: memref<8x48xf32, #tpu.memory_space<vmem>>, %arg1: memref<37x29xf32, #tpu.memory_space<vmem>>, %arg2: memref<2x2xf32, #tpu.memory_space<vmem>>) attributes {dimension_semantics = [], scalar_prefetch = 0 : i64, scratch_operands = 0 : i64, tpu.core_type = #tpu.core_type<tc>} {
    %c0 = arith.constant 0 : index
    %c0_0 = arith.constant 0 : index
    %0 = vector.load %arg1[%c0, %c0_0] : memref<37x29xf32, #tpu.memory_space<vmem>>, vector<24x18xf32>
    %cst = arith.constant 0.000000e+00 : f32
    %1 = vector.broadcast %cst : f32 to vector<8x32xf32>
    %cst_1 = arith.constant 0.000000e+00 : f32
    %2 = vector.broadcast %cst_1 : f32 to vector<8x32xf32>
    %cst_2 = arith.constant 0.000000e+00 : f32
    %3 = vector.broadcast %cst_2 : f32 to vector<8x32xf32>
    %c0_3 = arith.constant 0 : index
    %c0_4 = arith.constant 0 : index
    %4 = vector.load %arg0[%c0_3, %c0_4] : memref<8x48xf32, #tpu.memory_space<vmem>>, vector<8x32xf32>
    %5 = vector.extract_strided_slice %0 {offsets = [0, 0], sizes = [8, 1], strides = [1, 1]} : vector<24x18xf32> to vector<8x1xf32>
    %6 = vector.broadcast %5 : vector<8x1xf32> to vector<8x32xf32>
    %7 = arith.mulf %6, %4 : vector<8x32xf32>
    %8 = arith.addf %1, %7 : vector<8x32xf32>
    %9 = vector.extract_strided_slice %0 {offsets = [8, 0], sizes = [8, 1], strides = [1, 1]} : vector<24x18xf32> to vector<8x1xf32>
    %10 = vector.broadcast %9 : vector<8x1xf32> to vector<8x32xf32>
    %11 = arith.mulf %10, %4 : vector<8x32xf32>
    %12 = arith.addf %2, %11 : vector<8x32xf32>
    %13 = vector.extract_strided_slice %0 {offsets = [16, 0], sizes = [8, 1], strides = [1, 1]} : vector<24x18xf32> to vector<8x1xf32>
    %14 = vector.broadcast %13 : vector<8x1xf32> to vector<8x32xf32>
    %15 = arith.mulf %14, %4 : vector<8x32xf32>
    %16 = arith.addf %3, %15 : vector<8x32xf32>
    %c0_5 = arith.constant 0 : index
    %c1 = arith.constant 1 : index
    %17 = vector.load %arg0[%c0_5, %c1] : memref<8x48xf32, #tpu.memory_space<vmem>>, vector<8x32xf32>
    %18 = vector.extract_strided_slice %0 {offsets = [0, 1], sizes = [8, 1], strides = [1, 1]} : vector<24x18xf32> to vector<8x1xf32>
    %19 = vector.broadcast %18 : vector<8x1xf32> to vector<8x32xf32>
    %20 = arith.mulf %19, %17 : vector<8x32xf32>
    %21 = arith.addf %8, %20 : vector<8x32xf32>
    %22 = vector.extract_strided_slice %0 {offsets = [8, 1], sizes = [8, 1], strides = [1, 1]} : vector<24x18xf32> to vector<8x1xf32>
    %23 = vector.broadcast %22 : vector<8x1xf32> to vector<8x32xf32>
    %24 = arith.mulf %23, %17 : vector<8x32xf32>
    %25 = arith.addf %12, %24 : vector<8x32xf32>
    %26 = vector.extract_strided_slice %0 {offsets = [16, 1], sizes = [8, 1], strides = [1, 1]} : vector<24x18xf32> to vector<8x1xf32>
    %27 = vector.broadcast %26 : vector<8x1xf32> to vector<8x32xf32>
    %28 = arith.mulf %27, %17 : vector<8x32xf32>
    %29 = arith.addf %16, %28 : vector<8x32xf32>
    %c0_6 = arith.constant 0 : index
    %c2 = arith.constant 2 : index
    %30 = vector.load %arg0[%c0_6, %c2] : memref<8x48xf32, #tpu.memory_space<vmem>>, vector<8x32xf32>
    %31 = vector.extract_strided_slice %0 {offsets = [0, 2], sizes = [8, 1], strides = [1, 1]} : vector<24x18xf32> to vector<8x1xf32>
    %32 = vector.broadcast %31 : vector<8x1xf32> to vector<8x32xf32>
    %33 = arith.mulf %32, %30 : vector<8x32xf32>
    %34 = arith.addf %21, %33 : vector<8x32xf32>
    %35 = vector.extract_strided_slice %0 {offsets = [8, 2], sizes = [8, 1], strides = [1, 1]} : vector<24x18xf32> to vector<8x1xf32>
    %36 = vector.broadcast %35 : vector<8x1xf32> to vector<8x32xf32>
    %37 = arith.mulf %36, %30 : vector<8x32xf32>
    %38 = arith.addf %25, %37 : vector<8x32xf32>
    %39 = vector.extract_strided_slice %0 {offsets = [16, 2], sizes = [8, 1], strides = [1, 1]} : vector<24x18xf32> to vector<8x1xf32>
    %40 = vector.broadcast %39 : vector<8x1xf32> to vector<8x32xf32>
    %41 = arith.mulf %40, %30 : vector<8x32xf32>
    %42 = arith.addf %29, %41 : vector<8x32xf32>
    %c0_7 = arith.constant 0 : index
    %c3 = arith.constant 3 : index
    %43 = vector.load %arg0[%c0_7, %c3] : memref<8x48xf32, #tpu.memory_space<vmem>>, vector<8x32xf32>
    %44 = vector.extract_strided_slice %0 {offsets = [0, 3], sizes = [8, 1], strides = [1, 1]} : vector<24x18xf32> to vector<8x1xf32>
    %45 = vector.broadcast %44 : vector<8x1xf32> to vector<8x32xf32>
    %46 = arith.mulf %45, %43 : vector<8x32xf32>
    %47 = arith.addf %34, %46 : vector<8x32xf32>
    %48 = vector.extract_strided_slice %0 {offsets = [8, 3], sizes = [8, 1], strides = [1, 1]} : vector<24x18xf32> to vector<8x1xf32>
    %49 = vector.broadcast %48 : vector<8x1xf32> to vector<8x32xf32>
    %50 = arith.mulf %49, %43 : vector<8x32xf32>
    %51 = arith.addf %38, %50 : vector<8x32xf32>
    %52 = vector.extract_strided_slice %0 {offsets = [16, 3], sizes = [8, 1], strides = [1, 1]} : vector<24x18xf32> to vector<8x1xf32>
    %53 = vector.broadcast %52 : vector<8x1xf32> to vector<8x32xf32>
    %54 = arith.mulf %53, %43 : vector<8x32xf32>
    %55 = arith.addf %42, %54 : vector<8x32xf32>
    %c0_8 = arith.constant 0 : index
    %c4 = arith.constant 4 : index
    %56 = vector.load %arg0[%c0_8, %c4] : memref<8x48xf32, #tpu.memory_space<vmem>>, vector<8x32xf32>
    %57 = vector.extract_strided_slice %0 {offsets = [0, 4], sizes = [8, 1], strides = [1, 1]} : vector<24x18xf32> to vector<8x1xf32>
    %58 = vector.broadcast %57 : vector<8x1xf32> to vector<8x32xf32>
    %59 = arith.mulf %58, %56 : vector<8x32xf32>
    %60 = arith.addf %47, %59 : vector<8x32xf32>
    %61 = vector.extract_strided_slice %0 {offsets = [8, 4], sizes = [8, 1], strides = [1, 1]} : vector<24x18xf32> to vector<8x1xf32>
    %62 = vector.broadcast %61 : vector<8x1xf32> to vector<8x32xf32>
    %63 = arith.mulf %62, %56 : vector<8x32xf32>
    %64 = arith.addf %51, %63 : vector<8x32xf32>
    %65 = vector.extract_strided_slice %0 {offsets = [16, 4], sizes = [8, 1], strides = [1, 1]} : vector<24x18xf32> to vector<8x1xf32>
    %66 = vector.broadcast %65 : vector<8x1xf32> to vector<8x32xf32>
    %67 = arith.mulf %66, %56 : vector<8x32xf32>
    %68 = arith.addf %55, %67 : vector<8x32xf32>
    %c0_9 = arith.constant 0 : index
    %c5 = arith.constant 5 : index
    %69 = vector.load %arg0[%c0_9, %c5] : memref<8x48xf32, #tpu.memory_space<vmem>>, vector<8x32xf32>
    %70 = vector.extract_strided_slice %0 {offsets = [0, 5], sizes = [8, 1], strides = [1, 1]} : vector<24x18xf32> to vector<8x1xf32>
    %71 = vector.broadcast %70 : vector<8x1xf32> to vector<8x32xf32>
    %72 = arith.mulf %71, %69 : vector<8x32xf32>
    %73 = arith.addf %60, %72 : vector<8x32xf32>
    %74 = vector.extract_strided_slice %0 {offsets = [8, 5], sizes = [8, 1], strides = [1, 1]} : vector<24x18xf32> to vector<8x1xf32>
    %75 = vector.broadcast %74 : vector<8x1xf32> to vector<8x32xf32>
    %76 = arith.mulf %75, %69 : vector<8x32xf32>
    %77 = arith.addf %64, %76 : vector<8x32xf32>
    %78 = vector.extract_strided_slice %0 {offsets = [16, 5], sizes = [8, 1], strides = [1, 1]} : vector<24x18xf32> to vector<8x1xf32>
    %79 = vector.broadcast %78 : vector<8x1xf32> to vector<8x32xf32>
    %80 = arith.mulf %79, %69 : vector<8x32xf32>
    %81 = arith.addf %68, %80 : vector<8x32xf32>
    %c0_10 = arith.constant 0 : index
    %c6 = arith.constant 6 : index
    %82 = vector.load %arg0[%c0_10, %c6] : memref<8x48xf32, #tpu.memory_space<vmem>>, vector<8x32xf32>
    %83 = vector.extract_strided_slice %0 {offsets = [0, 6], sizes = [8, 1], strides = [1, 1]} : vector<24x18xf32> to vector<8x1xf32>
    %84 = vector.broadcast %83 : vector<8x1xf32> to vector<8x32xf32>
    %85 = arith.mulf %84, %82 : vector<8x32xf32>
    %86 = arith.addf %73, %85 : vector<8x32xf32>
    %87 = vector.extract_strided_slice %0 {offsets = [8, 6], sizes = [8, 1], strides = [1, 1]} : vector<24x18xf32> to vector<8x1xf32>
    %88 = vector.broadcast %87 : vector<8x1xf32> to vector<8x32xf32>
    %89 = arith.mulf %88, %82 : vector<8x32xf32>
    %90 = arith.addf %77, %89 : vector<8x32xf32>
    %91 = vector.extract_strided_slice %0 {offsets = [16, 6], sizes = [8, 1], strides = [1, 1]} : vector<24x18xf32> to vector<8x1xf32>
    %92 = vector.broadcast %91 : vector<8x1xf32> to vector<8x32xf32>
    %93 = arith.mulf %92, %82 : vector<8x32xf32>
    %94 = arith.addf %81, %93 : vector<8x32xf32>
    %c0_11 = arith.constant 0 : index
    %c7 = arith.constant 7 : index
    %95 = vector.load %arg0[%c0_11, %c7] : memref<8x48xf32, #tpu.memory_space<vmem>>, vector<8x32xf32>
    %96 = vector.extract_strided_slice %0 {offsets = [0, 7], sizes = [8, 1], strides = [1, 1]} : vector<24x18xf32> to vector<8x1xf32>
    %97 = vector.broadcast %96 : vector<8x1xf32> to vector<8x32xf32>
    %98 = arith.mulf %97, %95 : vector<8x32xf32>
    %99 = arith.addf %86, %98 : vector<8x32xf32>
    %100 = vector.extract_strided_slice %0 {offsets = [8, 7], sizes = [8, 1], strides = [1, 1]} : vector<24x18xf32> to vector<8x1xf32>
    %101 = vector.broadcast %100 : vector<8x1xf32> to vector<8x32xf32>
    %102 = arith.mulf %101, %95 : vector<8x32xf32>
    %103 = arith.addf %90, %102 : vector<8x32xf32>
    %104 = vector.extract_strided_slice %0 {offsets = [16, 7], sizes = [8, 1], strides = [1, 1]} : vector<24x18xf32> to vector<8x1xf32>
    %105 = vector.broadcast %104 : vector<8x1xf32> to vector<8x32xf32>
    %106 = arith.mulf %105, %95 : vector<8x32xf32>
    %107 = arith.addf %94, %106 : vector<8x32xf32>
    %c0_12 = arith.constant 0 : index
    %c8 = arith.constant 8 : index
    %108 = vector.load %arg0[%c0_12, %c8] : memref<8x48xf32, #tpu.memory_space<vmem>>, vector<8x32xf32>
    %109 = vector.extract_strided_slice %0 {offsets = [0, 8], sizes = [8, 1], strides = [1, 1]} : vector<24x18xf32> to vector<8x1xf32>
    %110 = vector.broadcast %109 : vector<8x1xf32> to vector<8x32xf32>
    %111 = arith.mulf %110, %108 : vector<8x32xf32>
    %112 = arith.addf %99, %111 : vector<8x32xf32>
    %113 = vector.extract_strided_slice %0 {offsets = [8, 8], sizes = [8, 1], strides = [1, 1]} : vector<24x18xf32> to vector<8x1xf32>
    %114 = vector.broadcast %113 : vector<8x1xf32> to vector<8x32xf32>
    %115 = arith.mulf %114, %108 : vector<8x32xf32>
    %116 = arith.addf %103, %115 : vector<8x32xf32>
    %117 = vector.extract_strided_slice %0 {offsets = [16, 8], sizes = [8, 1], strides = [1, 1]} : vector<24x18xf32> to vector<8x1xf32>
    %118 = vector.broadcast %117 : vector<8x1xf32> to vector<8x32xf32>
    %119 = arith.mulf %118, %108 : vector<8x32xf32>
    %120 = arith.addf %107, %119 : vector<8x32xf32>
    %c0_13 = arith.constant 0 : index
    %c9 = arith.constant 9 : index
    %121 = vector.load %arg0[%c0_13, %c9] : memref<8x48xf32, #tpu.memory_space<vmem>>, vector<8x32xf32>
    %122 = vector.extract_strided_slice %0 {offsets = [0, 9], sizes = [8, 1], strides = [1, 1]} : vector<24x18xf32> to vector<8x1xf32>
    %123 = vector.broadcast %122 : vector<8x1xf32> to vector<8x32xf32>
    %124 = arith.mulf %123, %121 : vector<8x32xf32>
    %125 = arith.addf %112, %124 : vector<8x32xf32>
    %126 = vector.extract_strided_slice %0 {offsets = [8, 9], sizes = [8, 1], strides = [1, 1]} : vector<24x18xf32> to vector<8x1xf32>
    %127 = vector.broadcast %126 : vector<8x1xf32> to vector<8x32xf32>
    %128 = arith.mulf %127, %121 : vector<8x32xf32>
    %129 = arith.addf %116, %128 : vector<8x32xf32>
    %130 = vector.extract_strided_slice %0 {offsets = [16, 9], sizes = [8, 1], strides = [1, 1]} : vector<24x18xf32> to vector<8x1xf32>
    %131 = vector.broadcast %130 : vector<8x1xf32> to vector<8x32xf32>
    %132 = arith.mulf %131, %121 : vector<8x32xf32>
    %133 = arith.addf %120, %132 : vector<8x32xf32>
    %c0_14 = arith.constant 0 : index
    %c10 = arith.constant 10 : index
    %134 = vector.load %arg0[%c0_14, %c10] : memref<8x48xf32, #tpu.memory_space<vmem>>, vector<8x32xf32>
    %135 = vector.extract_strided_slice %0 {offsets = [0, 10], sizes = [8, 1], strides = [1, 1]} : vector<24x18xf32> to vector<8x1xf32>
    %136 = vector.broadcast %135 : vector<8x1xf32> to vector<8x32xf32>
    %137 = arith.mulf %136, %134 : vector<8x32xf32>
    %138 = arith.addf %125, %137 : vector<8x32xf32>
    %139 = vector.extract_strided_slice %0 {offsets = [8, 10], sizes = [8, 1], strides = [1, 1]} : vector<24x18xf32> to vector<8x1xf32>
    %140 = vector.broadcast %139 : vector<8x1xf32> to vector<8x32xf32>
    %141 = arith.mulf %140, %134 : vector<8x32xf32>
    %142 = arith.addf %129, %141 : vector<8x32xf32>
    %143 = vector.extract_strided_slice %0 {offsets = [16, 10], sizes = [8, 1], strides = [1, 1]} : vector<24x18xf32> to vector<8x1xf32>
    %144 = vector.broadcast %143 : vector<8x1xf32> to vector<8x32xf32>
    %145 = arith.mulf %144, %134 : vector<8x32xf32>
    %146 = arith.addf %133, %145 : vector<8x32xf32>
    %c0_15 = arith.constant 0 : index
    %c11 = arith.constant 11 : index
    %147 = vector.load %arg0[%c0_15, %c11] : memref<8x48xf32, #tpu.memory_space<vmem>>, vector<8x32xf32>
    %148 = vector.extract_strided_slice %0 {offsets = [0, 11], sizes = [8, 1], strides = [1, 1]} : vector<24x18xf32> to vector<8x1xf32>
    %149 = vector.broadcast %148 : vector<8x1xf32> to vector<8x32xf32>
    %150 = arith.mulf %149, %147 : vector<8x32xf32>
    %151 = arith.addf %138, %150 : vector<8x32xf32>
    %152 = vector.extract_strided_slice %0 {offsets = [8, 11], sizes = [8, 1], strides = [1, 1]} : vector<24x18xf32> to vector<8x1xf32>
    %153 = vector.broadcast %152 : vector<8x1xf32> to vector<8x32xf32>
    %154 = arith.mulf %153, %147 : vector<8x32xf32>
    %155 = arith.addf %142, %154 : vector<8x32xf32>
    %156 = vector.extract_strided_slice %0 {offsets = [16, 11], sizes = [8, 1], strides = [1, 1]} : vector<24x18xf32> to vector<8x1xf32>
    %157 = vector.broadcast %156 : vector<8x1xf32> to vector<8x32xf32>
    %158 = arith.mulf %157, %147 : vector<8x32xf32>
    %159 = arith.addf %146, %158 : vector<8x32xf32>
    %c0_16 = arith.constant 0 : index
    %c12 = arith.constant 12 : index
    %160 = vector.load %arg0[%c0_16, %c12] : memref<8x48xf32, #tpu.memory_space<vmem>>, vector<8x32xf32>
    %161 = vector.extract_strided_slice %0 {offsets = [0, 12], sizes = [8, 1], strides = [1, 1]} : vector<24x18xf32> to vector<8x1xf32>
    %162 = vector.broadcast %161 : vector<8x1xf32> to vector<8x32xf32>
    %163 = arith.mulf %162, %160 : vector<8x32xf32>
    %164 = arith.addf %151, %163 : vector<8x32xf32>
    %165 = vector.extract_strided_slice %0 {offsets = [8, 12], sizes = [8, 1], strides = [1, 1]} : vector<24x18xf32> to vector<8x1xf32>
    %166 = vector.broadcast %165 : vector<8x1xf32> to vector<8x32xf32>
    %167 = arith.mulf %166, %160 : vector<8x32xf32>
    %168 = arith.addf %155, %167 : vector<8x32xf32>
    %169 = vector.extract_strided_slice %0 {offsets = [16, 12], sizes = [8, 1], strides = [1, 1]} : vector<24x18xf32> to vector<8x1xf32>
    %170 = vector.broadcast %169 : vector<8x1xf32> to vector<8x32xf32>
    %171 = arith.mulf %170, %160 : vector<8x32xf32>
    %172 = arith.addf %159, %171 : vector<8x32xf32>
    %c0_17 = arith.constant 0 : index
    %c13 = arith.constant 13 : index
    %173 = vector.load %arg0[%c0_17, %c13] : memref<8x48xf32, #tpu.memory_space<vmem>>, vector<8x32xf32>
    %174 = vector.extract_strided_slice %0 {offsets = [0, 13], sizes = [8, 1], strides = [1, 1]} : vector<24x18xf32> to vector<8x1xf32>
    %175 = vector.broadcast %174 : vector<8x1xf32> to vector<8x32xf32>
    %176 = arith.mulf %175, %173 : vector<8x32xf32>
    %177 = arith.addf %164, %176 : vector<8x32xf32>
    %178 = vector.extract_strided_slice %0 {offsets = [8, 13], sizes = [8, 1], strides = [1, 1]} : vector<24x18xf32> to vector<8x1xf32>
    %179 = vector.broadcast %178 : vector<8x1xf32> to vector<8x32xf32>
    %180 = arith.mulf %179, %173 : vector<8x32xf32>
    %181 = arith.addf %168, %180 : vector<8x32xf32>
    %182 = vector.extract_strided_slice %0 {offsets = [16, 13], sizes = [8, 1], strides = [1, 1]} : vector<24x18xf32> to vector<8x1xf32>
    %183 = vector.broadcast %182 : vector<8x1xf32> to vector<8x32xf32>
    %184 = arith.mulf %183, %173 : vector<8x32xf32>
    %185 = arith.addf %172, %184 : vector<8x32xf32>
    %c0_18 = arith.constant 0 : index
    %c14 = arith.constant 14 : index
    %186 = vector.load %arg0[%c0_18, %c14] : memref<8x48xf32, #tpu.memory_space<vmem>>, vector<8x32xf32>
    %187 = vector.extract_strided_slice %0 {offsets = [0, 14], sizes = [8, 1], strides = [1, 1]} : vector<24x18xf32> to vector<8x1xf32>
    %188 = vector.broadcast %187 : vector<8x1xf32> to vector<8x32xf32>
    %189 = arith.mulf %188, %186 : vector<8x32xf32>
    %190 = arith.addf %177, %189 : vector<8x32xf32>
    %191 = vector.extract_strided_slice %0 {offsets = [8, 14], sizes = [8, 1], strides = [1, 1]} : vector<24x18xf32> to vector<8x1xf32>
    %192 = vector.broadcast %191 : vector<8x1xf32> to vector<8x32xf32>
    %193 = arith.mulf %192, %186 : vector<8x32xf32>
    %194 = arith.addf %181, %193 : vector<8x32xf32>
    %195 = vector.extract_strided_slice %0 {offsets = [16, 14], sizes = [8, 1], strides = [1, 1]} : vector<24x18xf32> to vector<8x1xf32>
    %196 = vector.broadcast %195 : vector<8x1xf32> to vector<8x32xf32>
    %197 = arith.mulf %196, %186 : vector<8x32xf32>
    %198 = arith.addf %185, %197 : vector<8x32xf32>
    %c0_19 = arith.constant 0 : index
    %c15 = arith.constant 15 : index
    %199 = vector.load %arg0[%c0_19, %c15] : memref<8x48xf32, #tpu.memory_space<vmem>>, vector<8x32xf32>
    %200 = vector.extract_strided_slice %0 {offsets = [0, 15], sizes = [8, 1], strides = [1, 1]} : vector<24x18xf32> to vector<8x1xf32>
    %201 = vector.broadcast %200 : vector<8x1xf32> to vector<8x32xf32>
    %202 = arith.mulf %201, %199 : vector<8x32xf32>
    %203 = arith.addf %190, %202 : vector<8x32xf32>
    %204 = vector.extract_strided_slice %0 {offsets = [8, 15], sizes = [8, 1], strides = [1, 1]} : vector<24x18xf32> to vector<8x1xf32>
    %205 = vector.broadcast %204 : vector<8x1xf32> to vector<8x32xf32>
    %206 = arith.mulf %205, %199 : vector<8x32xf32>
    %207 = arith.addf %194, %206 : vector<8x32xf32>
    %208 = vector.extract_strided_slice %0 {offsets = [16, 15], sizes = [8, 1], strides = [1, 1]} : vector<24x18xf32> to vector<8x1xf32>
    %209 = vector.broadcast %208 : vector<8x1xf32> to vector<8x32xf32>
    %210 = arith.mulf %209, %199 : vector<8x32xf32>
    %211 = arith.addf %198, %210 : vector<8x32xf32>
    %c0_20 = arith.constant 0 : index
    %c16 = arith.constant 16 : index
    %212 = vector.load %arg0[%c0_20, %c16] : memref<8x48xf32, #tpu.memory_space<vmem>>, vector<8x32xf32>
    %213 = vector.extract_strided_slice %0 {offsets = [0, 16], sizes = [8, 1], strides = [1, 1]} : vector<24x18xf32> to vector<8x1xf32>
    %214 = vector.broadcast %213 : vector<8x1xf32> to vector<8x32xf32>
    %215 = arith.mulf %214, %212 : vector<8x32xf32>
    %216 = arith.addf %203, %215 : vector<8x32xf32>
    %217 = vector.extract_strided_slice %0 {offsets = [8, 16], sizes = [8, 1], strides = [1, 1]} : vector<24x18xf32> to vector<8x1xf32>
    %218 = vector.broadcast %217 : vector<8x1xf32> to vector<8x32xf32>
    %219 = arith.mulf %218, %212 : vector<8x32xf32>
    %220 = arith.addf %207, %219 : vector<8x32xf32>
    %221 = vector.extract_strided_slice %0 {offsets = [16, 16], sizes = [8, 1], strides = [1, 1]} : vector<24x18xf32> to vector<8x1xf32>
    %222 = vector.broadcast %221 : vector<8x1xf32> to vector<8x32xf32>
    %223 = arith.mulf %222, %212 : vector<8x32xf32>
    %224 = arith.addf %211, %223 : vector<8x32xf32>
    %225 = vector.extract_strided_slice %216 {offsets = [0, 0], sizes = [2, 32], strides = [1, 1]} : vector<8x32xf32> to vector<2x32xf32>
    %cst_21 = arith.constant 0.000000e+00 : f32
    %226 = vector.broadcast %cst_21 : f32 to vector<2x32xf32>
    %227 = arith.addf %226, %225 : vector<2x32xf32>
    %228 = vector.extract_strided_slice %216 {offsets = [2, 0], sizes = [2, 32], strides = [1, 1]} : vector<8x32xf32> to vector<2x32xf32>
    %229 = arith.addf %227, %228 : vector<2x32xf32>
    %230 = vector.extract_strided_slice %216 {offsets = [4, 0], sizes = [2, 32], strides = [1, 1]} : vector<8x32xf32> to vector<2x32xf32>
    %231 = arith.addf %229, %230 : vector<2x32xf32>
    %232 = vector.extract_strided_slice %216 {offsets = [6, 0], sizes = [2, 32], strides = [1, 1]} : vector<8x32xf32> to vector<2x32xf32>
    %233 = arith.addf %231, %232 : vector<2x32xf32>
    %234 = vector.extract_strided_slice %220 {offsets = [0, 0], sizes = [2, 32], strides = [1, 1]} : vector<8x32xf32> to vector<2x32xf32>
    %cst_22 = arith.constant 0.000000e+00 : f32
    %235 = vector.broadcast %cst_22 : f32 to vector<2x32xf32>
    %236 = arith.addf %235, %234 : vector<2x32xf32>
    %237 = vector.extract_strided_slice %220 {offsets = [2, 0], sizes = [2, 32], strides = [1, 1]} : vector<8x32xf32> to vector<2x32xf32>
    %238 = arith.addf %236, %237 : vector<2x32xf32>
    %239 = vector.extract_strided_slice %220 {offsets = [4, 0], sizes = [2, 32], strides = [1, 1]} : vector<8x32xf32> to vector<2x32xf32>
    %240 = arith.addf %238, %239 : vector<2x32xf32>
    %241 = vector.extract_strided_slice %220 {offsets = [6, 0], sizes = [2, 32], strides = [1, 1]} : vector<8x32xf32> to vector<2x32xf32>
    %242 = arith.addf %240, %241 : vector<2x32xf32>
    %243 = vector.extract_strided_slice %224 {offsets = [0, 0], sizes = [2, 32], strides = [1, 1]} : vector<8x32xf32> to vector<2x32xf32>
    %cst_23 = arith.constant 0.000000e+00 : f32
    %244 = vector.broadcast %cst_23 : f32 to vector<2x32xf32>
    %245 = arith.addf %244, %243 : vector<2x32xf32>
    %246 = vector.extract_strided_slice %224 {offsets = [2, 0], sizes = [2, 32], strides = [1, 1]} : vector<8x32xf32> to vector<2x32xf32>
    %247 = arith.addf %245, %246 : vector<2x32xf32>
    %248 = vector.extract_strided_slice %224 {offsets = [4, 0], sizes = [2, 32], strides = [1, 1]} : vector<8x32xf32> to vector<2x32xf32>
    %249 = arith.addf %247, %248 : vector<2x32xf32>
    %250 = vector.extract_strided_slice %224 {offsets = [6, 0], sizes = [2, 32], strides = [1, 1]} : vector<8x32xf32> to vector<2x32xf32>
    %251 = arith.addf %249, %250 : vector<2x32xf32>
    %252 = tpu.concatenate %233, %242, %251 in 0 : vector<2x32xf32>, vector<2x32xf32>, vector<2x32xf32> -> vector<6x32xf32>
    %253 = vector.extract_strided_slice %0 {offsets = [0, 17], sizes = [6, 1], strides = [1, 1]} : vector<24x18xf32> to vector<6x1xf32>
    %254 = vector.broadcast %253 : vector<6x1xf32> to vector<6x32xf32>
    %255 = arith.addf %252, %254 : vector<6x32xf32>
    %cst_24 = arith.constant 0.000000e+00 : f32
    %256 = vector.broadcast %cst_24 : f32 to vector<6x32xf32>
    %257 = arith.maximumf %255, %256 : vector<6x32xf32>
    %258 = vector.extract_strided_slice %257 {offsets = [0, 0], sizes = [6, 30], strides = [1, 1]} : vector<6x32xf32> to vector<6x30xf32>
    %259 = vector.extract_strided_slice %257 {offsets = [0, 2], sizes = [6, 30], strides = [1, 1]} : vector<6x32xf32> to vector<6x30xf32>
    %260 = arith.maximumf %258, %259 : vector<6x30xf32>
    %261 = vector.extract_strided_slice %260 {offsets = [0, 0], sizes = [6, 29], strides = [1, 1]} : vector<6x30xf32> to vector<6x29xf32>
    %262 = vector.extract_strided_slice %260 {offsets = [0, 1], sizes = [6, 29], strides = [1, 1]} : vector<6x30xf32> to vector<6x29xf32>
    %263 = arith.maximumf %261, %262 : vector<6x29xf32>
    %c24 = arith.constant 24 : index
    %c0_25 = arith.constant 0 : index
    %264 = vector.load %arg1[%c24, %c0_25] : memref<37x29xf32, #tpu.memory_space<vmem>>, vector<12x29xf32>
    %265 = vector.extract_strided_slice %264 {offsets = [0, 0], sizes = [6, 29], strides = [1, 1]} : vector<12x29xf32> to vector<6x29xf32>
    %266 = arith.mulf %263, %265 : vector<6x29xf32>
    %cst_26 = arith.constant dense<0.000000e+00> : vector<6xf32>
    %267 = vector.multi_reduction <add>, %266, %cst_26 [1] : vector<6x29xf32> to vector<6xf32>
    %268 = vector.shape_cast %267 : vector<6xf32> to vector<6x1xf32>
    %269 = vector.extract_strided_slice %268 {offsets = [0, 0], sizes = [2, 1], strides = [1, 1]} : vector<6x1xf32> to vector<2x1xf32>
    %cst_27 = arith.constant 0.000000e+00 : f32
    %270 = vector.broadcast %cst_27 : f32 to vector<2x1xf32>
    %271 = arith.addf %270, %269 : vector<2x1xf32>
    %272 = vector.extract_strided_slice %268 {offsets = [2, 0], sizes = [2, 1], strides = [1, 1]} : vector<6x1xf32> to vector<2x1xf32>
    %273 = arith.addf %271, %272 : vector<2x1xf32>
    %274 = vector.extract_strided_slice %268 {offsets = [4, 0], sizes = [2, 1], strides = [1, 1]} : vector<6x1xf32> to vector<2x1xf32>
    %275 = arith.addf %273, %274 : vector<2x1xf32>
    %276 = vector.extract_strided_slice %264 {offsets = [6, 0], sizes = [6, 29], strides = [1, 1]} : vector<12x29xf32> to vector<6x29xf32>
    %277 = arith.mulf %263, %276 : vector<6x29xf32>
    %cst_28 = arith.constant dense<0.000000e+00> : vector<6xf32>
    %278 = vector.multi_reduction <add>, %277, %cst_28 [1] : vector<6x29xf32> to vector<6xf32>
    %279 = vector.shape_cast %278 : vector<6xf32> to vector<6x1xf32>
    %280 = vector.extract_strided_slice %279 {offsets = [0, 0], sizes = [2, 1], strides = [1, 1]} : vector<6x1xf32> to vector<2x1xf32>
    %cst_29 = arith.constant 0.000000e+00 : f32
    %281 = vector.broadcast %cst_29 : f32 to vector<2x1xf32>
    %282 = arith.addf %281, %280 : vector<2x1xf32>
    %283 = vector.extract_strided_slice %279 {offsets = [2, 0], sizes = [2, 1], strides = [1, 1]} : vector<6x1xf32> to vector<2x1xf32>
    %284 = arith.addf %282, %283 : vector<2x1xf32>
    %285 = vector.extract_strided_slice %279 {offsets = [4, 0], sizes = [2, 1], strides = [1, 1]} : vector<6x1xf32> to vector<2x1xf32>
    %286 = arith.addf %284, %285 : vector<2x1xf32>
    %287 = tpu.concatenate %275, %286 in 1 : vector<2x1xf32>, vector<2x1xf32> -> vector<2x2xf32>
    %c36 = arith.constant 36 : index
    %c0_30 = arith.constant 0 : index
    %288 = vector.load %arg1[%c36, %c0_30] : memref<37x29xf32, #tpu.memory_space<vmem>>, vector<1x2xf32>
    %289 = vector.broadcast %288 : vector<1x2xf32> to vector<2x2xf32>
    %290 = arith.addf %287, %289 : vector<2x2xf32>
    %c0_31 = arith.constant 0 : index
    %c0_32 = arith.constant 0 : index
    %291 = vector.load %arg2[%c0_31, %c0_32] : memref<2x2xf32, #tpu.memory_space<vmem>>, vector<2x2xf32>
    tpu.vector_store %arg2[%c0_31, %c0_32], %290 {strides = array<i32>} : memref<2x2xf32, #tpu.memory_space<vmem>>, vector<2x2xf32>,
    return
  }
}

</mosaic_0001>

<llo_original>
// kernel: forward.1
$region0: #{forward.1}
  #allocation0 [shape = 'u32[]', space=smem, size = 0x4, offset = 0x4, fixed_abs, tag = 'smem constant byte address 0x4 - core index']
  #allocation1 [shape = 'u32[144,128]{1,0:T(1,128)}', space=vmem, size = 0x12000, scoped, tag = 'internal scratch']
  %s0 = inlined_call_operand.vmem [shape: f32[8,48], index: 0, kind: input, shape index: {}]
  %s1 = inlined_call_operand.hbm [shape: f32[37,29], index: 1, kind: input, shape index: {}]
  %s2 = inlined_call_operand.hbm [shape: f32[2,2], index: 2, kind: output, shape index: {}]
  %s3 = sld [smem:[#allocation0]]
  $region22: #{forward.1} parent=0
    _
  %s5 = ssub.s32 1, %s3
  %s6 = scalar_select 0, %s5, %s3
  $region1: #{forward.1} parent=0
    #allocation2 [shape = 'u8[20480]{0}', space=vmem, size = 0x5000, scoped, tag = 'input window, operand 1, single buffered']
    #allocation3 [shape = 's32[1]{0}', space=sflag, size = 0x4, scoped, tag = 'scoped memory for forward.1']
    #allocation4 [shape = 's32[1]{0}', space=sflag, size = 0x4, scoped, tag = 'scoped memory for forward.1']
    #allocation5 [shape = 'u8[1024]{0}', space=vmem, size = 0x400, scoped, tag = 'output window, operand 0, single buffered']
    %7 = vsyncpa [#allocation3], 0
    %8 = vsyncpa [#allocation4], 0
    // Predicated region
    $region2: #{forward.1} parent=1 // pred_check
      _
    $region3: #{forward.1} parent=1 // pred_check_branch
      %10 = sbr.rel (0) target = $region5
    $region4: #{forward.1} parent=1 // pred_region
      _
    $region5: #{forward.1} parent=1 // pred_fallthru
      _
    // Predicated region
    $region6: #{forward.1} parent=1 // pred_check
      _
    $region7: #{forward.1} parent=1 // pred_check_branch
      %12 = sbr.rel (0) target = $region9
    $region8: #{forward.1} parent=1 // pred_region
      %s14 = ssub.s32 640, 640
      %15 = vsyncadd [#allocation3], %s14
      %s16 = sshll.u32 [#allocation2], 4
      %s17 = int_to_ptr.vmem [resolvable:$true] %s16
      %22 = dma.hbm_to_vmem [thread:$0]  %s1, 640, %s17, [#allocation3], 128, 128, 8
    $region9: #{forward.1} parent=1 // pred_fallthru
      _
    // Predicated region
    $region10: #{forward.1} parent=1 // pred_check
      _
    $region11: #{forward.1} parent=1 // pred_check_branch
      %24 = sbr.rel (0) target = $region13
    $region12: #{forward.1} parent=1 // pred_region
      %25 = dma.done [#allocation3], 640
    $region13: #{forward.1} parent=1 // pred_fallthru
      _
    %v26 = vld [vmem:[#allocation2] sm:$0xff]
    %v27 = vld [vmem:[#allocation2 + $0x8] sm:$0xff]
    %v28 = vld [vmem:[#allocation2 + $0x10] sm:$0xff]
    %v29 = vld [vmem:[%s0] sm:$0xff]
    %31 = vset.pattern.permute.xlu0 0
    %32 = vperm.xlu0 %31, %v26
    %v33 = vpop.permute.xlu0 %32
    %v35 = vmul.f32 %v33, %v29
    %v36 = vadd.f32 %v35, 0.0
    %38 = vset.pattern.permute.xlu0 0
    %39 = vperm.xlu0 %38, %v27
    %v40 = vpop.permute.xlu0 %39
    %v42 = vmul.f32 %v40, %v29
    %v43 = vadd.f32 %v42, 0.0
    %45 = vset.pattern.permute.xlu0 0
    %46 = vperm.xlu0 %45, %v28
    %v47 = vpop.permute.xlu0 %46
    %v49 = vmul.f32 %v47, %v29
    %v50 = vadd.f32 %v49, 0.0
    %51 = vset.pattern.permute.xlu0 1
    %52 = vperm.xlu0 %51, %v26
    %v53 = vpop.permute.xlu0 %52
    %v55 = vmul.f32 %v53, %v29
    %57 = vrot.lane.b32.xlu0 %v55, 127
    %v58 = vpop.permute.xlu0 %57
    %v60 = vadd.f32 %v36, %v58
    %61 = vset.pattern.permute.xlu0 1
    %62 = vperm.xlu0 %61, %v27
    %v63 = vpop.permute.xlu0 %62
    %v65 = vmul.f32 %v63, %v29
    %67 = vrot.lane.b32.xlu0 %v65, 127
    %v68 = vpop.permute.xlu0 %67
    %v70 = vadd.f32 %v43, %v68
    %71 = vset.pattern.permute.xlu0 1
    %72 = vperm.xlu0 %71, %v28
    %v73 = vpop.permute.xlu0 %72
    %v75 = vmul.f32 %v73, %v29
    %77 = vrot.lane.b32.xlu0 %v75, 127
    %v78 = vpop.permute.xlu0 %77
    %v80 = vadd.f32 %v50, %v78
    %81 = vset.pattern.permute.xlu0 2
    %82 = vperm.xlu0 %81, %v26
    %v83 = vpop.permute.xlu0 %82
    %v85 = vmul.f32 %v83, %v29
    %87 = vrot.lane.b32.xlu0 %v85, 126
    %v88 = vpop.permute.xlu0 %87
    %v90 = vadd.f32 %v60, %v88
    %91 = vset.pattern.permute.xlu0 2
    %92 = vperm.xlu0 %91, %v27
    %v93 = vpop.permute.xlu0 %92
    %v95 = vmul.f32 %v93, %v29
    %97 = vrot.lane.b32.xlu0 %v95, 126
    %v98 = vpop.permute.xlu0 %97
    %v100 = vadd.f32 %v70, %v98
    %101 = vset.pattern.permute.xlu0 2
    %102 = vperm.xlu0 %101, %v28
    %v103 = vpop.permute.xlu0 %102
    %v105 = vmul.f32 %v103, %v29
    %107 = vrot.lane.b32.xlu0 %v105, 126
    %v108 = vpop.permute.xlu0 %107
    %v110 = vadd.f32 %v80, %v108
    %111 = vset.pattern.permute.xlu0 3
    %112 = vperm.xlu0 %111, %v26
    %v113 = vpop.permute.xlu0 %112
    %v115 = vmul.f32 %v113, %v29
    %117 = vrot.lane.b32.xlu0 %v115, 125
    %v118 = vpop.permute.xlu0 %117
    %v120 = vadd.f32 %v90, %v118
    %121 = vset.pattern.permute.xlu0 3
    %122 = vperm.xlu0 %121, %v27
    %v123 = vpop.permute.xlu0 %122
    %v125 = vmul.f32 %v123, %v29
    %127 = vrot.lane.b32.xlu0 %v125, 125
    %v128 = vpop.permute.xlu0 %127
    %v130 = vadd.f32 %v100, %v128
    %131 = vset.pattern.permute.xlu0 3
    %132 = vperm.xlu0 %131, %v28
    %v133 = vpop.permute.xlu0 %132
    %v135 = vmul.f32 %v133, %v29
    %137 = vrot.lane.b32.xlu0 %v135, 125
    %v138 = vpop.permute.xlu0 %137
    %v140 = vadd.f32 %v110, %v138
    %141 = vset.pattern.permute.xlu0 4
    %142 = vperm.xlu0 %141, %v26
    %v143 = vpop.permute.xlu0 %142
    %v145 = vmul.f32 %v143, %v29
    %147 = vrot.lane.b32.xlu0 %v145, 124
    %v148 = vpop.permute.xlu0 %147
    %v150 = vadd.f32 %v120, %v148
    %151 = vset.pattern.permute.xlu0 4
    %152 = vperm.xlu0 %151, %v27
    %v153 = vpop.permute.xlu0 %152
    %v155 = vmul.f32 %v153, %v29
    %157 = vrot.lane.b32.xlu0 %v155, 124
    %v158 = vpop.permute.xlu0 %157
    %v160 = vadd.f32 %v130, %v158
    %161 = vset.pattern.permute.xlu0 4
    %162 = vperm.xlu0 %161, %v28
    %v163 = vpop.permute.xlu0 %162
    %v165 = vmul.f32 %v163, %v29
    %167 = vrot.lane.b32.xlu0 %v165, 124
    %v168 = vpop.permute.xlu0 %167
    %v170 = vadd.f32 %v140, %v168
    %171 = vset.pattern.permute.xlu0 5
    %172 = vperm.xlu0 %171, %v26
    %v173 = vpop.permute.xlu0 %172
    %v175 = vmul.f32 %v173, %v29
    %177 = vrot.lane.b32.xlu0 %v175, 123
    %v178 = vpop.permute.xlu0 %177
    %v180 = vadd.f32 %v150, %v178
    %181 = vset.pattern.permute.xlu0 5
    %182 = vperm.xlu0 %181, %v27
    %v183 = vpop.permute.xlu0 %182
    %v185 = vmul.f32 %v183, %v29
    %187 = vrot.lane.b32.xlu0 %v185, 123
    %v188 = vpop.permute.xlu0 %187
    %v190 = vadd.f32 %v160, %v188
    %191 = vset.pattern.permute.xlu0 5
    %192 = vperm.xlu0 %191, %v28
    %v193 = vpop.permute.xlu0 %192
    %v195 = vmul.f32 %v193, %v29
    %197 = vrot.lane.b32.xlu0 %v195, 123
    %v198 = vpop.permute.xlu0 %197
    %v200 = vadd.f32 %v170, %v198
    %201 = vset.pattern.permute.xlu0 6
    %202 = vperm.xlu0 %201, %v26
    %v203 = vpop.permute.xlu0 %202
    %v205 = vmul.f32 %v203, %v29
    %207 = vrot.lane.b32.xlu0 %v205, 122
    %v208 = vpop.permute.xlu0 %207
    %v210 = vadd.f32 %v180, %v208
    %211 = vset.pattern.permute.xlu0 6
    %212 = vperm.xlu0 %211, %v27
    %v213 = vpop.permute.xlu0 %212
    %v215 = vmul.f32 %v213, %v29
    %217 = vrot.lane.b32.xlu0 %v215, 122
    %v218 = vpop.permute.xlu0 %217
    %v220 = vadd.f32 %v190, %v218
    %221 = vset.pattern.permute.xlu0 6
    %222 = vperm.xlu0 %221, %v28
    %v223 = vpop.permute.xlu0 %222
    %v225 = vmul.f32 %v223, %v29
    %227 = vrot.lane.b32.xlu0 %v225, 122
    %v228 = vpop.permute.xlu0 %227
    %v230 = vadd.f32 %v200, %v228
    %231 = vset.pattern.permute.xlu0 7
    %232 = vperm.xlu0 %231, %v26
    %v233 = vpop.permute.xlu0 %232
    %v235 = vmul.f32 %v233, %v29
    %237 = vrot.lane.b32.xlu0 %v235, 121
    %v238 = vpop.permute.xlu0 %237
    %v240 = vadd.f32 %v210, %v238
    %241 = vset.pattern.permute.xlu0 7
    %242 = vperm.xlu0 %241, %v27
    %v243 = vpop.permute.xlu0 %242
    %v245 = vmul.f32 %v243, %v29
    %247 = vrot.lane.b32.xlu0 %v245, 121
    %v248 = vpop.permute.xlu0 %247
    %v250 = vadd.f32 %v220, %v248
    %251 = vset.pattern.permute.xlu0 7
    %252 = vperm.xlu0 %251, %v28
    %v253 = vpop.permute.xlu0 %252
    %v255 = vmul.f32 %v253, %v29
    %257 = vrot.lane.b32.xlu0 %v255, 121
    %v258 = vpop.permute.xlu0 %257
    %v260 = vadd.f32 %v230, %v258
    %261 = vset.pattern.permute.xlu0 8
    %262 = vperm.xlu0 %261, %v26
    %v263 = vpop.permute.xlu0 %262
    %v265 = vmul.f32 %v263, %v29
    %267 = vrot.lane.b32.xlu0 %v265, 120
    %v268 = vpop.permute.xlu0 %267
    %v270 = vadd.f32 %v240, %v268
    %271 = vset.pattern.permute.xlu0 8
    %272 = vperm.xlu0 %271, %v27
    %v273 = vpop.permute.xlu0 %272
    %v275 = vmul.f32 %v273, %v29
    %277 = vrot.lane.b32.xlu0 %v275, 120
    %v278 = vpop.permute.xlu0 %277
    %v280 = vadd.f32 %v250, %v278
    %281 = vset.pattern.permute.xlu0 8
    %282 = vperm.xlu0 %281, %v28
    %v283 = vpop.permute.xlu0 %282
    %v285 = vmul.f32 %v283, %v29
    %287 = vrot.lane.b32.xlu0 %v285, 120
    %v288 = vpop.permute.xlu0 %287
    %v290 = vadd.f32 %v260, %v288
    %291 = vset.pattern.permute.xlu0 9
    %292 = vperm.xlu0 %291, %v26
    %v293 = vpop.permute.xlu0 %292
    %v295 = vmul.f32 %v293, %v29
    %297 = vrot.lane.b32.xlu0 %v295, 119
    %v298 = vpop.permute.xlu0 %297
    %v300 = vadd.f32 %v270, %v298
    %301 = vset.pattern.permute.xlu0 9
    %302 = vperm.xlu0 %301, %v27
    %v303 = vpop.permute.xlu0 %302
    %v305 = vmul.f32 %v303, %v29
    %307 = vrot.lane.b32.xlu0 %v305, 119
    %v308 = vpop.permute.xlu0 %307
    %v310 = vadd.f32 %v280, %v308
    %311 = vset.pattern.permute.xlu0 9
    %312 = vperm.xlu0 %311, %v28
    %v313 = vpop.permute.xlu0 %312
    %v315 = vmul.f32 %v313, %v29
    %317 = vrot.lane.b32.xlu0 %v315, 119
    %v318 = vpop.permute.xlu0 %317
    %v320 = vadd.f32 %v290, %v318
    %321 = vset.pattern.permute.xlu0 10
    %322 = vperm.xlu0 %321, %v26
    %v323 = vpop.permute.xlu0 %322
    %v325 = vmul.f32 %v323, %v29
    %327 = vrot.lane.b32.xlu0 %v325, 118
    %v328 = vpop.permute.xlu0 %327
    %v330 = vadd.f32 %v300, %v328
    %331 = vset.pattern.permute.xlu0 10
    %332 = vperm.xlu0 %331, %v27
    %v333 = vpop.permute.xlu0 %332
    %v335 = vmul.f32 %v333, %v29
    %337 = vrot.lane.b32.xlu0 %v335, 118
    %v338 = vpop.permute.xlu0 %337
    %v340 = vadd.f32 %v310, %v338
    %341 = vset.pattern.permute.xlu0 10
    %342 = vperm.xlu0 %341, %v28
    %v343 = vpop.permute.xlu0 %342
    %v345 = vmul.f32 %v343, %v29
    %347 = vrot.lane.b32.xlu0 %v345, 118
    %v348 = vpop.permute.xlu0 %347
    %v350 = vadd.f32 %v320, %v348
    %351 = vset.pattern.permute.xlu0 11
    %352 = vperm.xlu0 %351, %v26
    %v353 = vpop.permute.xlu0 %352
    %v355 = vmul.f32 %v353, %v29
    %357 = vrot.lane.b32.xlu0 %v355, 117
    %v358 = vpop.permute.xlu0 %357
    %v360 = vadd.f32 %v330, %v358
    %361 = vset.pattern.permute.xlu0 11
    %362 = vperm.xlu0 %361, %v27
    %v363 = vpop.permute.xlu0 %362
    %v365 = vmul.f32 %v363, %v29
    %367 = vrot.lane.b32.xlu0 %v365, 117
    %v368 = vpop.permute.xlu0 %367
    %v370 = vadd.f32 %v340, %v368
    %371 = vset.pattern.permute.xlu0 11
    %372 = vperm.xlu0 %371, %v28
    %v373 = vpop.permute.xlu0 %372
    %v375 = vmul.f32 %v373, %v29
    %377 = vrot.lane.b32.xlu0 %v375, 117
    %v378 = vpop.permute.xlu0 %377
    %v380 = vadd.f32 %v350, %v378
    %381 = vset.pattern.permute.xlu0 12
    %382 = vperm.xlu0 %381, %v26
    %v383 = vpop.permute.xlu0 %382
    %v385 = vmul.f32 %v383, %v29
    %387 = vrot.lane.b32.xlu0 %v385, 116
    %v388 = vpop.permute.xlu0 %387
    %v390 = vadd.f32 %v360, %v388
    %391 = vset.pattern.permute.xlu0 12
    %392 = vperm.xlu0 %391, %v27
    %v393 = vpop.permute.xlu0 %392
    %v395 = vmul.f32 %v393, %v29
    %397 = vrot.lane.b32.xlu0 %v395, 116
    %v398 = vpop.permute.xlu0 %397
    %v400 = vadd.f32 %v370, %v398
    %401 = vset.pattern.permute.xlu0 12
    %402 = vperm.xlu0 %401, %v28
    %v403 = vpop.permute.xlu0 %402
    %v405 = vmul.f32 %v403, %v29
    %407 = vrot.lane.b32.xlu0 %v405, 116
    %v408 = vpop.permute.xlu0 %407
    %v410 = vadd.f32 %v380, %v408
    %411 = vset.pattern.permute.xlu0 13
    %412 = vperm.xlu0 %411, %v26
    %v413 = vpop.permute.xlu0 %412
    %v415 = vmul.f32 %v413, %v29
    %417 = vrot.lane.b32.xlu0 %v415, 115
    %v418 = vpop.permute.xlu0 %417
    %v420 = vadd.f32 %v390, %v418
    %421 = vset.pattern.permute.xlu0 13
    %422 = vperm.xlu0 %421, %v27
    %v423 = vpop.permute.xlu0 %422
    %v425 = vmul.f32 %v423, %v29
    %427 = vrot.lane.b32.xlu0 %v425, 115
    %v428 = vpop.permute.xlu0 %427
    %v430 = vadd.f32 %v400, %v428
    %431 = vset.pattern.permute.xlu0 13
    %432 = vperm.xlu0 %431, %v28
    %v433 = vpop.permute.xlu0 %432
    %v435 = vmul.f32 %v433, %v29
    %437 = vrot.lane.b32.xlu0 %v435, 115
    %v438 = vpop.permute.xlu0 %437
    %v440 = vadd.f32 %v410, %v438
    %441 = vset.pattern.permute.xlu0 14
    %442 = vperm.xlu0 %441, %v26
    %v443 = vpop.permute.xlu0 %442
    %v445 = vmul.f32 %v443, %v29
    %447 = vrot.lane.b32.xlu0 %v445, 114
    %v448 = vpop.permute.xlu0 %447
    %v450 = vadd.f32 %v420, %v448
    %451 = vset.pattern.permute.xlu0 14
    %452 = vperm.xlu0 %451, %v27
    %v453 = vpop.permute.xlu0 %452
    %v455 = vmul.f32 %v453, %v29
    %457 = vrot.lane.b32.xlu0 %v455, 114
    %v458 = vpop.permute.xlu0 %457
    %v460 = vadd.f32 %v430, %v458
    %461 = vset.pattern.permute.xlu0 14
    %462 = vperm.xlu0 %461, %v28
    %v463 = vpop.permute.xlu0 %462
    %v465 = vmul.f32 %v463, %v29
    %467 = vrot.lane.b32.xlu0 %v465, 114
    %v468 = vpop.permute.xlu0 %467
    %v470 = vadd.f32 %v440, %v468
    %471 = vset.pattern.permute.xlu0 15
    %472 = vperm.xlu0 %471, %v26
    %v473 = vpop.permute.xlu0 %472
    %v475 = vmul.f32 %v473, %v29
    %477 = vrot.lane.b32.xlu0 %v475, 113
    %v478 = vpop.permute.xlu0 %477
    %v480 = vadd.f32 %v450, %v478
    %481 = vset.pattern.permute.xlu0 15
    %482 = vperm.xlu0 %481, %v27
    %v483 = vpop.permute.xlu0 %482
    %v485 = vmul.f32 %v483, %v29
    %487 = vrot.lane.b32.xlu0 %v485, 113
    %v488 = vpop.permute.xlu0 %487
    %v490 = vadd.f32 %v460, %v488
    %491 = vset.pattern.permute.xlu0 15
    %492 = vperm.xlu0 %491, %v28
    %v493 = vpop.permute.xlu0 %492
    %v495 = vmul.f32 %v493, %v29
    %497 = vrot.lane.b32.xlu0 %v495, 113
    %v498 = vpop.permute.xlu0 %497
    %v500 = vadd.f32 %v470, %v498
    %501 = vset.pattern.permute.xlu0 16
    %502 = vperm.xlu0 %501, %v26
    %v503 = vpop.permute.xlu0 %502
    %v505 = vmul.f32 %v503, %v29
    %507 = vrot.lane.b32.xlu0 %v505, 112
    %v508 = vpop.permute.xlu0 %507
    %v510 = vadd.f32 %v480, %v508
    %511 = vset.pattern.permute.xlu0 16
    %512 = vperm.xlu0 %511, %v27
    %v513 = vpop.permute.xlu0 %512
    %v515 = vmul.f32 %v513, %v29
    %517 = vrot.lane.b32.xlu0 %v515, 112
    %v518 = vpop.permute.xlu0 %517
    %v520 = vadd.f32 %v490, %v518
    %521 = vset.pattern.permute.xlu0 16
    %522 = vperm.xlu0 %521, %v28
    %v523 = vpop.permute.xlu0 %522
    %v525 = vmul.f32 %v523, %v29
    %527 = vrot.lane.b32.xlu0 %v525, 112
    %v528 = vpop.permute.xlu0 %527
    %v530 = vadd.f32 %v500, %v528
    %v531 = vadd.f32 %v510, 0.0
    %v533 = vrot.slane %v510, 2
    %v535 = vadd.f32 %v531, %v533
    %v536 = vrot.slane %v510, 4
    %v538 = vadd.f32 %v535, %v536
    %v539 = vrot.slane %v510, 6
    %v541 = vadd.f32 %v538, %v539
    %v542 = vadd.f32 %v520, 0.0
    %v544 = vrot.slane %v520, 2
    %v546 = vadd.f32 %v542, %v544
    %v547 = vrot.slane %v520, 4
    %v549 = vadd.f32 %v546, %v547
    %v550 = vrot.slane %v520, 6
    %v552 = vadd.f32 %v549, %v550
    %v553 = vadd.f32 %v530, 0.0
    %v555 = vrot.slane %v530, 2
    %v557 = vadd.f32 %v553, %v555
    %v558 = vrot.slane %v530, 4
    %v560 = vadd.f32 %v557, %v558
    %v561 = vrot.slane %v530, 6
    %v563 = vadd.f32 %v560, %v561
    %v565 = vrot.slane %v552, 6
    %v568 = vrot.slane %v563, 4
    %vm570 = vcmask 1041408
    %v571 = vsel %vm570, %v541, %v565
    %vm572 = vcmask 1043456
    %v573 = vsel %vm572, %v571, %v568
    %574 = vset.pattern.permute.xlu0 17
    %575 = vperm.xlu0 %574, %v26
    %v576 = vpop.permute.xlu0 %575
    %v578 = vadd.f32 %v573, %v576
    %v579 = vmax.f32 %v578, 0.0
    %581 = vrot.lane.b32.xlu0 %v579, 126
    %v582 = vpop.permute.xlu0 %581
    %v584 = vmax.f32 %v579, %v582
    %586 = vrot.lane.b32.xlu0 %v584, 127
    %v587 = vpop.permute.xlu0 %586
    %v589 = vmax.f32 %v584, %v587
    %v590 = vld [vmem:[#allocation2 + $0x18] sm:$0xff]
    %v591 = vld [vmem:[#allocation2 + $0x20] sm:$0xf]
    %v592 = vmul.f32 %v589, %v590
    %vm593 = vcmask 234496
    %v594 = vsel %vm593, %v592, 0.0
    %595 = vadd.xlane.f32.xlu0 %v594
    %v596 = vpop.xlane.xlu0 %595
    %v597 = vadd.f32 %v596, 0.0
    %v599 = vrot.slane %v596, 2
    %v601 = vadd.f32 %v597, %v599
    %v602 = vrot.slane %v596, 4
    %v604 = vadd.f32 %v601, %v602
    %v607 = vrot.slane %v590, 6
    %v608 = vrot.slane %v591, 6
    %v609 = vsel %vm570, %v607, %v608
    %v611 = vmul.f32 %v589, %v609
    %v612 = vsel %vm593, %v611, 0.0
    %613 = vadd.xlane.f32.xlu0 %v612
    %v614 = vpop.xlane.xlu0 %613
    %v615 = vadd.f32 %v614, 0.0
    %v617 = vrot.slane %v614, 2
    %v619 = vadd.f32 %v615, %v617
    %v620 = vrot.slane %v614, 4
    %v622 = vadd.f32 %v619, %v620
    %624 = vrot.lane.b32.xlu0 %v622, 1
    %v625 = vpop.permute.xlu0 %624
    %vm627 = vcmask 7168
    %v628 = vsel %vm627, %v604, %v625
    %v629 = vld [vmem:[#allocation2 + $0x24] sm:$0x1]
    %v630 = vlaneseq
    %v631 = vshrl.u32 %v630, 7
    %v632 = vsub.s32 0, %v631
    %v633 = vrot.slane %v629, %v632
    %v634 = vadd.f32 %v628, %v633
    %vm635 = vcmask 9216
    %636 = vst.msk [vmem:[#allocation5] sm:$0x3] %vm635, %v634
    // Predicated region
    $region14: #{forward.1} parent=1 // pred_check
      _
    $region15: #{forward.1} parent=1 // pred_check_branch
      %638 = sbr.rel (0) target = $region17
    $region16: #{forward.1} parent=1 // pred_region
      %s640 = ssub.s32 32, 32
      %641 = vsyncadd [#allocation4], %s640
      %s643 = sshll.u32 [#allocation5], 4
      %s644 = int_to_ptr.vmem [resolvable:$true] %s643
      %646 = dma.vmem_to_hbm [thread:$0]  %s644, 32, %s2, [#allocation4]
    $region17: #{forward.1} parent=1 // pred_fallthru
      _
    // Predicated region
    $region18: #{forward.1} parent=1 // pred_check
      _
    $region19: #{forward.1} parent=1 // pred_check_branch
      %648 = sbr.rel (0) target = $region21
    $region20: #{forward.1} parent=1 // pred_region
      %649 = dma.done [#allocation4], 32
    $region21: #{forward.1} parent=1 // pred_fallthru
      _
    %650 = vsyncpa [#allocation3], 1
    %651 = vsyncpa [#allocation4], 1

</llo_original>
